<compile_context>
chip_gen: v5e
topology: v5e:2x2
jax: 0.10.0
libtpu: 0.0.40
codegen_flags: <defaults>
</compile_context>

<pallas_src>
import functools
import math

import jax
import jax.numpy as jnp
from jax import lax
from jax.experimental import pallas as pl
from jax.experimental.pallas import tpu as pltpu


# ---------------------------------------------------------------------------
# Deterministic "parameter" construction (the module's weight_map)
# ---------------------------------------------------------------------------
def create_edge_weight_map(patch_size, edge_weight=10):
    H, W = patch_size
    wm = jnp.ones((H, W), dtype=jnp.float32)
    wm = wm.at[:, :1].multiply(edge_weight)
    wm = wm.at[:, -1:].multiply(edge_weight)
    wm = wm.at[:1, :].multiply(edge_weight)
    wm = wm.at[-1:, :].multiply(edge_weight)
    return wm


def create_refined_edge_weight_map(patch_size, edge_weight=10):
    # Faithful to the PyTorch reference: torch.meshgrid(x, y) (default 'ij') puts
    # x (length W) on the first axis. Identical to the reference; only matters if
    # H != W, which the module never does (square patch_size).
    H, W = patch_size
    y = jnp.linspace(-1.0, 1.0, H) ** 2
    x = jnp.linspace(-1.0, 1.0, W) ** 2
    xv, yv = jnp.meshgrid(x, y, indexing="ij")
    wm = 1.0 + (edge_weight - 1.0) * jnp.sqrt(xv ** 2 + yv ** 2)
    return wm.astype(jnp.float32)


def build_weight_map(patch_size=16, edge_weight=10):
    refined = create_refined_edge_weight_map((patch_size, patch_size),
                                             edge_weight=edge_weight)
    hard = create_edge_weight_map((patch_size, patch_size),
                                  edge_weight=edge_weight // 2)
    # (1, H, W, 1) -- same as unsqueeze(0).unsqueeze(-1) in the module
    return (refined + hard)[None, :, :, None].astype(jnp.float32)


def _lcm(a, b):
    return a * b // math.gcd(a, b)


# ---------------------------------------------------------------------------
# Pallas kernel: fused (pred - target)^2 * weight, per-block (8, cn) partial sum
# ---------------------------------------------------------------------------
def _ewl_block_kernel(pred_ref, tgt_ref, w_ref, out_ref, *, wu, k, rb, cn,
                      n_rows, n_cols, mask_rows, mask_cols):
    # pred/tgt block: (rb, cn); weight block: (wu, cn) with rb == k * wu and the
    # block row offset a multiple of wu, so the weight tiles exactly k times.
    p = pred_ref[...].astype(jnp.float32)
    t = tgt_ref[...].astype(jnp.float32)
    d = p - t
    sq = d * d                                            # (rb, cn)

    w = w_ref[...].astype(jnp.float32)                    # (wu, cn)
    if k == 1:
        wt = sq * w
    else:
        # Sublane-aligned split (wu % 8 == 0) -> layout-preserving reshape.
        wt = (sq.reshape(k, wu, cn) * w[None, :, :]).reshape(rb, cn)

    # Mask ragged tail blocks (only traced when the grid actually has a tail;
    # OOB block contents are unspecified on TPU so they must not reach the sum).
    if mask_rows or mask_cols:
        valid = None
        if mask_rows:
            rows = (lax.broadcasted_iota(jnp.int32, (rb, cn), 0)
                    + pl.program_id(0) * rb)
            valid = rows < n_rows
        if mask_cols:
            cols = (lax.broadcasted_iota(jnp.int32, (rb, cn), 1)
                    + pl.program_id(1) * cn)
            cvalid = cols < n_cols
            valid = cvalid if valid is None else (valid & cvalid)
        wt = jnp.where(valid, wt, 0.0)

    # Vector partial: fold row groups of 8 sublanes and add (pure VPU vreg adds),
    # store a full (8, cn) tile. Cross-lane reduction is deferred to the wrapper.
    out_ref[...] = jnp.sum(wt.reshape(rb // 8, 8, cn), axis=0)


# ---------------------------------------------------------------------------
# Wrapper
# ---------------------------------------------------------------------------
def edge_weighted_loss(prediction, target, weight_map):
    """prediction/target: (B, H, W, C); weight_map: (1, H, W, 1). Returns scalar."""
    B, H, W, C = prediction.shape
    assert target.shape == prediction.shape
    n_elems = B * H * W * C

    R = B * H            # rows of the folded 2D view
    Wc = W * C           # lane-dense columns of the folded 2D view

    # Sublane packing unit: 8 for 32-bit inputs, 16 for packed (bf16 etc.) inputs.
    sub = 8 if jnp.dtype(prediction.dtype).itemsize >= 4 else 16
    WU = _lcm(H, sub)    # row-block unit: multiple of H (weight period) and of sublanes

    # Layout no-op reshapes (no HBM copy).
    pred2 = prediction.reshape(R, Wc)
    tgt2 = target.reshape(R, Wc)

    # Weight: (1,H,W,1) -> broadcast over C -> (H, Wc) -> tile rows up to WU (tiny).
    w_hw = jnp.broadcast_to(weight_map.astype(jnp.float32), (1, H, W, C)).reshape(H, Wc)
    w_unit = jnp.tile(w_hw, (WU // H, 1))                 # (WU, Wc)

    # Tiny-input fallback only: if there are fewer rows than one sublane unit,
    # pad rows once (the arrays are minuscule in this case, so the pad is free).
    if R < WU:
        pad_r = WU - R
        pred2 = jnp.pad(pred2, ((0, pad_r), (0, 0)))
        tgt2 = jnp.pad(tgt2, ((0, pad_r), (0, 0)))
        R_rows = WU
    else:
        R_rows = R

    # ---- tile sizing: ~1M elements (~4 MiB f32) per streamed input per step ----
    TARGET_ELEMS = 1 << 20

    if WU * Wc <= TARGET_ELEMS or Wc <= 256:
        cn, g1 = Wc, 1                                    # single lane-dense column block
    else:
        cn_budget = max(128, (TARGET_ELEMS // WU) // 128 * 128)
        cn = min(cn_budget, (Wc // 128) * 128)            # multiple of 128, <= Wc
        g1 = pl.cdiv(Wc, cn)

    row_units = R_rows // WU                              # >= 1
    units_budget = max(1, TARGET_ELEMS // (WU * cn))
    units = min(units_budget, row_units)
    if g1 == 1 and row_units >= 2:
        # Keep >= 2 grid steps so v7x can shard across both TensorCores.
        units = min(units, pl.cdiv(row_units, 2))
    rb = units * WU
    g0 = pl.cdiv(R_rows, rb)

    mask_rows = (R_rows % rb) != 0
    mask_cols = (Wc % cn) != 0

    # Pad the (tiny) weight so its column blocks are always in-bounds.
    w_cols = g1 * cn
    if w_cols != Wc:
        w_unit = jnp.pad(w_unit, ((0, 0), (0, w_cols - Wc)))

    kernel = functools.partial(
        _ewl_block_kernel,
        wu=WU, k=rb // WU, rb=rb, cn=cn,
        n_rows=R_rows, n_cols=Wc,
        mask_rows=mask_rows, mask_cols=mask_cols)

    partials = pl.pallas_call(
        kernel,
        out_shape=jax.ShapeDtypeStruct((g0 * 8, g1 * cn), jnp.float32),
        grid_spec=pltpu.PrefetchScalarGridSpec(
            num_scalar_prefetch=0,
            grid=(g0, g1),
            in_specs=[
                pl.BlockSpec((rb, cn), lambda i, j: (i, j)),
                pl.BlockSpec((rb, cn), lambda i, j: (i, j)),
                # Constant along i; with g1 == 1 (patch-sized weight) this block is
                # DMA'd once and stays resident for the whole grid.
                pl.BlockSpec((WU, cn), lambda i, j: (0, j)),
            ],
            out_specs=pl.BlockSpec((8, cn), lambda i, j: (i, j)),
        ),
        compiler_params=pltpu.CompilerParams(
            dimension_semantics=("parallel", "parallel"),
            vmem_limit_bytes=40 * 1024 * 1024,
        ),
    )(pred2, tgt2, w_unit)

    # Single tiny cross-lane reduction + mean over the ORIGINAL element count.
    total = jnp.sum(partials)
    # mean(dim=(0,1,-1)).mean() == full mean over all elements
    return total / jnp.float32(n_elems)


# ---------------------------------------------------------------------------
# Pure-JAX reference (sanity check only)
# ---------------------------------------------------------------------------
def edge_weighted_loss_ref(prediction, target, weight_map):
    per_element = (prediction.astype(jnp.float32) - target.astype(jnp.float32)) ** 2
    weighted = per_element * weight_map
    return weighted.mean(axis=(0, 1, -1)).mean()


if __name__ == "__main__":
    key = jax.random.PRNGKey(0)

    # (B, H, W, C, patch_size) configs: main case, k>1 row-fold case, ragged-tail case.
    configs = [
        (2, 16, 16, 4, 16),
        (6, 16, 16, 3, 16),
        (5, 12, 12, 3, 12),
    ]

    for idx, (B, H, W, C, patch_size) in enumerate(configs):
        key, k_pred, k_tgt = jax.random.split(key, 3)
        prediction = jax.random.normal(k_pred, (B, H, W, C), dtype=jnp.float32)
        target = jax.random.normal(k_tgt, (B, H, W, C), dtype=jnp.float32)
        weight_map = build_weight_map(patch_size=patch_size, edge_weight=10)

        loss = edge_weighted_loss(prediction, target, weight_map)
        loss = jax.block_until_ready(loss)

        ref = edge_weighted_loss_ref(prediction, target, weight_map)
        assert jnp.allclose(loss, ref, rtol=1e-5, atol=1e-5), (idx, loss, ref)

    print("KERNEL_OK")
</pallas_src>

<mosaic_0001>
module attributes {stable_mosaic.version = 11 : i64} {
  func.func @_ewl_block_kernel(%arg0: i32, %arg1: i32, %arg2: memref<16x64xf32, #tpu.memory_space<vmem>>, %arg3: memref<16x64xf32, #tpu.memory_space<vmem>>, %arg4: memref<16x64xf32, #tpu.memory_space<vmem>>, %arg5: memref<8x64xf32, #tpu.memory_space<vmem>>) attributes {dimension_semantics = [#tpu.dimension_semantics<parallel>, #tpu.dimension_semantics<parallel>], iteration_bounds = array<i64: 2, 1>, scalar_prefetch = 0 : i64, scratch_operands = 0 : i64, tpu.core_type = #tpu.core_type<tc>, window_params = [{transform_indices = @transform_0, window_bounds = array<i64: 16, 64>}, {transform_indices = @transform_1, window_bounds = array<i64: 16, 64>}, {transform_indices = @transform_2, window_bounds = array<i64: 16, 64>}, {transform_indices = @transform_3, window_bounds = array<i64: 8, 64>}]} {
    %c0 = arith.constant 0 : index
    %c0_0 = arith.constant 0 : index
    %0 = vector.load %arg2[%c0, %c0_0] : memref<16x64xf32, #tpu.memory_space<vmem>>, vector<16x64xf32>
    %c0_1 = arith.constant 0 : index
    %c0_2 = arith.constant 0 : index
    %1 = vector.load %arg3[%c0_1, %c0_2] : memref<16x64xf32, #tpu.memory_space<vmem>>, vector<16x64xf32>
    %2 = arith.subf %0, %1 : vector<16x64xf32>
    %3 = arith.mulf %2, %2 : vector<16x64xf32>
    %c0_3 = arith.constant 0 : index
    %c0_4 = arith.constant 0 : index
    %4 = vector.load %arg4[%c0_3, %c0_4] : memref<16x64xf32, #tpu.memory_space<vmem>>, vector<16x64xf32>
    %5 = arith.mulf %3, %4 : vector<16x64xf32>
    %6 = vector.shape_cast %5 : vector<16x64xf32> to vector<2x8x64xf32>
    %cst = arith.constant dense<0.000000e+00> : vector<8x64xf32>
    %7 = vector.multi_reduction <add>, %6, %cst [0] : vector<2x8x64xf32> to vector<8x64xf32>
    %c0_5 = arith.constant 0 : index
    %c0_6 = arith.constant 0 : index
    %8 = vector.load %arg5[%c0_5, %c0_6] : memref<8x64xf32, #tpu.memory_space<vmem>>, vector<8x64xf32>
    tpu.vector_store %arg5[%c0_5, %c0_6], %7 {strides = array<i32>} : memref<8x64xf32, #tpu.memory_space<vmem>>, vector<8x64xf32>,
    return
  }
  func.func @transform_0(%arg0: i32, %arg1: i32) -> (i32, i32) {
    %c0_i32 = arith.constant 0 : i32
    return %arg0, %arg1 : i32, i32
  }
  func.func @transform_1(%arg0: i32, %arg1: i32) -> (i32, i32) {
    %c0_i32 = arith.constant 0 : i32
    return %arg0, %arg1 : i32, i32
  }
  func.func @transform_2(%arg0: i32, %arg1: i32) -> (i32, i32) {
    %c0_i32 = arith.constant 0 : i32
    %c0_i32_0 = arith.constant 0 : i32
    return %c0_i32, %arg1 : i32, i32
  }
  func.func @transform_3(%arg0: i32, %arg1: i32) -> (i32, i32) {
    %c0_i32 = arith.constant 0 : i32
    return %arg0, %arg1 : i32, i32
  }
}

</mosaic_0001>

<llo_original>
// kernel: tpu_custom_call.1
$region0: #{tpu_custom_call.1}
  #allocation0 [shape = 'u32[]', space=smem, size = 0x4, offset = 0x4, fixed_abs, tag = 'smem constant byte address 0x4 - core index']
  #allocation1 [shape = 'u32[72,128]{1,0:T(1,128)}', space=vmem, size = 0x9000, scoped, tag = 'internal scratch']
  %s0 = inlined_call_operand.hbm [shape: f32[32,64], index: 0, kind: input, shape index: {}]
  %s1 = inlined_call_operand.hbm [shape: f32[32,64], index: 1, kind: input, shape index: {}]
  %s2 = inlined_call_operand.hbm [shape: f32[16,64], index: 2, kind: input, shape index: {}]
  %s3 = inlined_call_operand.hbm [shape: f32[16,64], index: 3, kind: output, shape index: {}]
  %s4 = sld [smem:[#allocation0]]
  $region57: #{tpu_custom_call.1} parent=0
    _
  %s6 = ssub.s32 1, %s4
  %s7 = scalar_select 0, %s6, %s4
  $region1: #{tpu_custom_call.1} parent=0
    #allocation2 [shape = 'u8[16384]{0}', space=vmem, size = 0x4000, scoped, tag = 'input window, operand 0']
    #allocation3 [shape = 's32[2]{0}', space=sflag, size = 0x8, scoped, tag = 'scoped memory for tpu_custom_call.1']
    #allocation4 [shape = 's32[2]{0}', space=sflag, size = 0x8, scoped, tag = 'scoped memory for tpu_custom_call.1']
    #allocation5 [shape = 'u8[16384]{0}', space=vmem, size = 0x4000, scoped, tag = 'input window, operand 1']
    #allocation6 [shape = 's32[2]{0}', space=sflag, size = 0x8, scoped, tag = 'scoped memory for tpu_custom_call.1']
    #allocation7 [shape = 'u8[8192]{0}', space=vmem, size = 0x2000, scoped, tag = 'input window, operand 2, single buffered']
    #allocation8 [shape = 'u8[8192]{0}', space=vmem, size = 0x2000, scoped, tag = 'output window, operand 0']
    %8 = vsyncpa [#allocation3], 0
    %s9 = scalar_lea.sflag [#allocation3], 1
    %10 = vsyncpa %s9, 0
    %11 = vsyncpa [#allocation6], 0
    %s12 = scalar_lea.sflag [#allocation6], 1
    %13 = vsyncpa %s12, 0
    %14 = vsyncpa [#allocation4], 0
    %s15 = scalar_lea.sflag [#allocation4], 1
    %16 = vsyncpa %s15, 0
    loop: start=0, step=1, limit=4
    $region2: #{tpu_custom_call.1} parent=1 // loop_pre_header
      _
    $region3: #{tpu_custom_call.1} parent=1 // loop_header
      %s18 = sphi 0, %s22
      %p19 = scmp.ge.s32.totalorder %s18, 4
      %s25 = sphi 0, %s37
      %s26 = sphi 0, %s33
      %s27 = sphi 0, %s25
      %s28 = sphi 0, %s26
      %s29 = sphi 0, %s27
      %s30 = sphi 0, %s28
      %s42 = sphi 0, %s44
      %s45 = sphi 0, %s42
      %s46 = sphi 0, %s45
      %s62 = sphi 0, %s46
      %s70 = sphi 0, %s72
      %s73 = sphi 0, %s70
      %s74 = sphi 0, %s73
      %s90 = sphi 0, %s74
      %s96 = sphi 0, %s98
      %s99 = sphi 0, %s96
      %s100 = sphi 0, %s99
      %s116 = sphi 0, %s100
      %s124 = sphi 0, %s126
      %s127 = sphi 0, %s124
      %s128 = sphi 0, %s127
      %s144 = sphi 0, %s128
    $region4: #{tpu_custom_call.1} parent=1 // loop_header_branch
      %21 = sbr.rel (%p19) target = $region8
    $region5: #{tpu_custom_call.1} parent=1 // loop_body
      %s23 = ssub.s32 %s18, 1
      %s24 = ssub.s32 %s18, 2
      %s31 = sadd.s32 1, %s26
      %p32 = scmp.ge.s32.totalorder %s31, 1
      %s33 = scalar_select %p32, 0, %s31
      %s34 = sadd.s32 1, %s25
      %s35 = scalar_select %p32, %s34, %s25
      %p36 = scmp.ge.s32.totalorder %s35, 2
      %s37 = scalar_select %p36, 0, %s35
      %s38 = ssub.s32 %s25, %s37
      %s39 = ssub.s32 %s26, %s33
      %s40 = sor.u32 %s38, %s39
      %p41 = scmp.eq.s32.totalorder %s40, 0
      %s43 = sadd.s32 %s42, 1
      %s44 = scalar_select %p41, %s42, %s43
      %p47 = pneg %p41
      %p48 = scmp.eq.s32.totalorder %s18, 1
      %p49 = por %p47, %p48
      %p50 = scmp.ne.s32.totalorder %s42, %s45
      %p51 = scmp.eq.s32.totalorder %s18, 0
      %p52 = por %p50, %p51
      %p53 = scmp.ne.s32.totalorder %s42, %s45
      %p54 = scmp.eq.s32.totalorder %s23, 1
      %p55 = por %p53, %p54
      %p56 = scmp.ne.s32.totalorder %s45, %s46
      %p57 = scmp.eq.s32.totalorder %s23, 0
      %p58 = por %p56, %p57
      %p59 = scmp.ne.s32.totalorder %s45, %s46
      %p60 = scmp.eq.s32.totalorder %s24, 1
      %p61 = por %p59, %p60
      %p63 = scmp.ne.s32.totalorder %s46, %s62
      %p64 = scmp.eq.s32.totalorder %s24, 0
      %p65 = por %p63, %p64
      %s66 = ssub.s32 %s25, %s37
      %s67 = ssub.s32 %s26, %s33
      %s68 = sor.u32 %s66, %s67
      %p69 = scmp.eq.s32.totalorder %s68, 0
      %s71 = sadd.s32 %s70, 1
      %s72 = scalar_select %p69, %s70, %s71
      %p75 = pneg %p69
      %p76 = scmp.eq.s32.totalorder %s18, 1
      %p77 = por %p75, %p76
      %p78 = scmp.ne.s32.totalorder %s70, %s73
      %p79 = scmp.eq.s32.totalorder %s18, 0
      %p80 = por %p78, %p79
      %p81 = scmp.ne.s32.totalorder %s70, %s73
      %p82 = scmp.eq.s32.totalorder %s23, 1
      %p83 = por %p81, %p82
      %p84 = scmp.ne.s32.totalorder %s73, %s74
      %p85 = scmp.eq.s32.totalorder %s23, 0
      %p86 = por %p84, %p85
      %p87 = scmp.ne.s32.totalorder %s73, %s74
      %p88 = scmp.eq.s32.totalorder %s24, 1
      %p89 = por %p87, %p88
      %p91 = scmp.ne.s32.totalorder %s74, %s90
      %p92 = scmp.eq.s32.totalorder %s24, 0
      %p93 = por %p91, %p92
      %s94 = ssub.s32 %s26, %s33
      %p95 = scmp.eq.s32.totalorder %s94, 0
      %s97 = sadd.s32 %s96, 1
      %s98 = scalar_select %p95, %s96, %s97
      %p101 = pneg %p95
      %p102 = scmp.eq.s32.totalorder %s18, 1
      %p103 = por %p101, %p102
      %p104 = scmp.ne.s32.totalorder %s96, %s99
      %p105 = scmp.eq.s32.totalorder %s18, 0
      %p106 = por %p104, %p105
      %p107 = scmp.ne.s32.totalorder %s96, %s99
      %p108 = scmp.eq.s32.totalorder %s23, 1
      %p109 = por %p107, %p108
      %p110 = scmp.ne.s32.totalorder %s99, %s100
      %p111 = scmp.eq.s32.totalorder %s23, 0
      %p112 = por %p110, %p111
      %p113 = scmp.ne.s32.totalorder %s99, %s100
      %p114 = scmp.eq.s32.totalorder %s24, 1
      %p115 = por %p113, %p114
      %p117 = scmp.ne.s32.totalorder %s100, %s116
      %p118 = scmp.eq.s32.totalorder %s24, 0
      %p119 = por %p117, %p118
      %s120 = ssub.s32 %s25, %s37
      %s121 = ssub.s32 %s26, %s33
      %s122 = sor.u32 %s120, %s121
      %p123 = scmp.eq.s32.totalorder %s122, 0
      %s125 = sadd.s32 %s124, 1
      %s126 = scalar_select %p123, %s124, %s125
      %p129 = pneg %p123
      %p130 = scmp.eq.s32.totalorder %s18, 1
      %p131 = por %p129, %p130
      %p132 = scmp.ne.s32.totalorder %s124, %s127
      %p133 = scmp.eq.s32.totalorder %s18, 0
      %p134 = por %p132, %p133
      %p135 = scmp.ne.s32.totalorder %s124, %s127
      %p136 = scmp.eq.s32.totalorder %s23, 1
      %p137 = por %p135, %p136
      %p138 = scmp.ne.s32.totalorder %s127, %s128
      %p139 = scmp.eq.s32.totalorder %s23, 0
      %p140 = por %p138, %p139
      %p141 = scmp.ne.s32.totalorder %s127, %s128
      %p142 = scmp.eq.s32.totalorder %s24, 1
      %p143 = por %p141, %p142
      %p145 = scmp.ne.s32.totalorder %s128, %s144
      %p146 = scmp.eq.s32.totalorder %s24, 0
      %p147 = por %p145, %p146
      %p148 = scmp.le.s32.totalorder 1, %s18
      %p149 = scmp.lt.s32.totalorder %s18, 3
      %p150 = pnand %p148, %p149
      %p151 = pneg %p150
      // Predicated region
      $region9: #{tpu_custom_call.1} parent=5 // pred_check
        _
      $region10: #{tpu_custom_call.1} parent=5 // pred_check_branch
        %153 = sbr.rel (%p150) target = $region12
      $region11: #{tpu_custom_call.1} parent=5 // pred_region
        %s154 = ssub.s32 %s18, 1
        // Predicated region
        $region13: #{tpu_custom_call.1} parent=11 // pred_check
          %p155 = pneg %p112
        $region14: #{tpu_custom_call.1} parent=11 // pred_check_branch
          %157 = sbr.rel (%p155) target = $region16
        $region15: #{tpu_custom_call.1} parent=11 // pred_region
          %159 = vsyncadd [#allocation6], 0
          %s160 = smul.addr %s28, 8
          %s161 = scalar_lea.hbm %s2, %s160
          %s162 = sshll.u32 %s161, 4
          %s163 = int_to_ptr.hbm [resolvable:$true] %s162
          %s164 = sshll.u32 [#allocation7], 4
          %s165 = int_to_ptr.vmem [resolvable:$true] %s164
          %170 = dma.hbm_to_vmem [thread:$0]  %s163, 256, %s165, [#allocation6], 128, 128, 8
        $region16: #{tpu_custom_call.1} parent=11 // pred_fallthru
          _
      $region12: #{tpu_custom_call.1} parent=5 // pred_fallthru
        _
      %p171 = scmp.lt.s32.totalorder %s18, 2
      // Predicated region
      $region17: #{tpu_custom_call.1} parent=5 // pred_check
        %p172 = pneg %p171
      $region18: #{tpu_custom_call.1} parent=5 // pred_check_branch
        %174 = sbr.rel (%p172) target = $region20
      $region19: #{tpu_custom_call.1} parent=5 // pred_region
        // Predicated region
        $region21: #{tpu_custom_call.1} parent=19 // pred_check
          %p175 = pneg %p52
        $region22: #{tpu_custom_call.1} parent=19 // pred_check_branch
          %177 = sbr.rel (%p175) target = $region24
        $region23: #{tpu_custom_call.1} parent=19 // pred_region
          %s178 = sand.u32 %s42, 1
          %s179 = scalar_lea.sflag [#allocation3], %s178
          %s180 = sand.u32 %s42, 1
          %s181 = smul.addr %s180, 16
          %s182 = scalar_lea.vmem [#allocation2], %s181
          %s183 = smul.u32 2, %s25
          %185 = vsyncadd %s179, 0
          %s186 = sadd.s32 %s26, %s183
          %s187 = smul.addr %s186, 8
          %s188 = scalar_lea.hbm %s0, %s187
          %s189 = sshll.u32 %s188, 4
          %s190 = int_to_ptr.hbm [resolvable:$true] %s189
          %s191 = sshll.u32 %s182, 4
          %s192 = int_to_ptr.vmem [resolvable:$true] %s191
          %197 = dma.hbm_to_vmem [thread:$0]  %s190, 256, %s192, %s179, 128, 128, 8
        $region24: #{tpu_custom_call.1} parent=19 // pred_fallthru
          _
        // Predicated region
        $region25: #{tpu_custom_call.1} parent=19 // pred_check
          %p198 = pneg %p80
        $region26: #{tpu_custom_call.1} parent=19 // pred_check_branch
          %200 = sbr.rel (%p198) target = $region28
        $region27: #{tpu_custom_call.1} parent=19 // pred_region
          %s201 = sand.u32 %s18, 1
          %s202 = scalar_lea.sflag [#allocation6], %s201
          %s203 = sand.u32 %s70, 1
          %s204 = smul.addr %s203, 16
          %s205 = scalar_lea.vmem [#allocation5], %s204
          %s206 = smul.u32 2, %s25
          %208 = vsyncadd %s202, 0
          %s209 = sadd.s32 %s26, %s206
          %s210 = smul.addr %s209, 8
          %s211 = scalar_lea.hbm %s1, %s210
          %s212 = sshll.u32 %s211, 4
          %s213 = int_to_ptr.hbm [resolvable:$true] %s212
          %s214 = sshll.u32 %s205, 4
          %s215 = int_to_ptr.vmem [resolvable:$true] %s214
          %220 = dma.hbm_to_vmem [thread:$0]  %s213, 256, %s215, %s202, 128, 128, 8
        $region28: #{tpu_custom_call.1} parent=19 // pred_fallthru
          _
      $region20: #{tpu_custom_call.1} parent=5 // pred_fallthru
        _
      %p221 = scmp.le.s32.totalorder 1, %s18
      %p222 = scmp.lt.s32.totalorder %s18, 3
      %p223 = pnand %p221, %p222
      %p224 = pneg %p223
      // Predicated region
      $region29: #{tpu_custom_call.1} parent=5 // pred_check
        _
      $region30: #{tpu_custom_call.1} parent=5 // pred_check_branch
        %226 = sbr.rel (%p223) target = $region32
      $region31: #{tpu_custom_call.1} parent=5 // pred_region
        %s227 = ssub.s32 %s18, 1
        %s228 = sand.u32 %s45, 1
        %s229 = scalar_lea.sflag [#allocation3], %s228
        %s230 = sand.u32 %s45, 1
        %s231 = smul.addr %s230, 16
        %s232 = scalar_lea.vmem [#allocation2], %s231
        // Predicated region
        $region33: #{tpu_custom_call.1} parent=31 // pred_check
          %p233 = pneg %p58
        $region34: #{tpu_custom_call.1} parent=31 // pred_check_branch
          %235 = sbr.rel (%p233) target = $region36
        $region35: #{tpu_custom_call.1} parent=31 // pred_region
          %237 = dma.done %s229, 256
        $region36: #{tpu_custom_call.1} parent=31 // pred_fallthru
          _
        %s238 = sand.u32 %s23, 1
        %s239 = scalar_lea.sflag [#allocation6], %s238
        %s240 = sand.u32 %s73, 1
        %s241 = smul.addr %s240, 16
        %s242 = scalar_lea.vmem [#allocation5], %s241
        // Predicated region
        $region37: #{tpu_custom_call.1} parent=31 // pred_check
          %p243 = pneg %p86
        $region38: #{tpu_custom_call.1} parent=31 // pred_check_branch
          %245 = sbr.rel (%p243) target = $region40
        $region39: #{tpu_custom_call.1} parent=31 // pred_region
          %247 = dma.done %s239, 256
        $region40: #{tpu_custom_call.1} parent=31 // pred_fallthru
          _
        // Predicated region
        $region41: #{tpu_custom_call.1} parent=31 // pred_check
          %p248 = pneg %p112
        $region42: #{tpu_custom_call.1} parent=31 // pred_check_branch
          %250 = sbr.rel (%p248) target = $region44
        $region43: #{tpu_custom_call.1} parent=31 // pred_region
          %252 = dma.done [#allocation6], 256
        $region44: #{tpu_custom_call.1} parent=31 // pred_fallthru
          _
        %s253 = sand.u32 %s45, 1
        %s254 = scalar_lea.sflag [#allocation3], %s253
        %s255 = sand.u32 %s45, 1
        %s256 = smul.addr %s255, 16
        %s257 = scalar_lea.vmem [#allocation2], %s256
        %p258 = pneg %p58
        %p259 = pneg %p55
        %s260 = sand.u32 %s23, 1
        %s261 = scalar_lea.sflag [#allocation6], %s260
        %s262 = sand.u32 %s73, 1
        %s263 = smul.addr %s262, 16
        %s264 = scalar_lea.vmem [#allocation5], %s263
        %p265 = pneg %p86
        %p266 = pneg %p83
        %p267 = pneg %p112
        %p268 = pneg %p109
        %p269 = pneg %p140
        %p270 = pneg %p137
        %s271 = sand.u32 %s127, 1
        %s272 = scalar_lea.sflag [#allocation4], %s271
        %s273 = sand.u32 %s127, 1
        %s274 = smul.addr %s273, 8
        %s275 = scalar_lea.vmem [#allocation8], %s274
        %s276 = smul.u32 2, %s27
        %s277 = smul.u32 2, %s27
        %v278 = vld [vmem:[%s232] sm:$0xff]
        %v279 = vld [vmem:[%s232 + $0x8] sm:$0xff]
        %v280 = vld [vmem:[%s242] sm:$0xff]
        %v281 = vld [vmem:[%s242 + $0x8] sm:$0xff]
        %v282 = vsub.f32 %v278, %v280
        %v283 = vsub.f32 %v279, %v281
        %v284 = vmul.f32 %v282, %v282
        %v285 = vmul.f32 %v283, %v283
        %v286 = vld [vmem:[#allocation7] sm:$0xff]
        %v287 = vld [vmem:[#allocation7 + $0x8] sm:$0xff]
        %v288 = vmul.f32 %v284, %v286
        %v289 = vmul.f32 %v285, %v287
        %vm290 = vcmask 523264
        %v291 = vsel %vm290, %v288, 0.0
        %v292 = vsel %vm290, %v289, 0.0
        %v293 = vadd.f32 %v291, %v292
        %294 = vst.msk [vmem:[%s275] sm:$0xff] %vm290, %v293
        %s295 = sand.u32 %s127, 1
        %s296 = scalar_lea.sflag [#allocation4], %s295
        %s297 = sand.u32 %s127, 1
        %s298 = smul.addr %s297, 8
        %s299 = scalar_lea.vmem [#allocation8], %s298
        // Predicated region
        $region45: #{tpu_custom_call.1} parent=31 // pred_check
          %p300 = pneg %p137
        $region46: #{tpu_custom_call.1} parent=31 // pred_check_branch
          %302 = sbr.rel (%p300) target = $region48
        $region47: #{tpu_custom_call.1} parent=31 // pred_region
          %304 = vsyncadd %s296, 0
          %s305 = sadd.s32 %s28, %s27
          %s306 = smul.addr %s305, 8
          %s307 = scalar_lea.hbm %s3, %s306
          %s309 = sshll.u32 %s299, 4
          %s310 = int_to_ptr.vmem [resolvable:$true] %s309
          %s311 = sshll.u32 %s307, 4
          %s312 = int_to_ptr.hbm [resolvable:$true] %s311
          %314 = dma.vmem_to_hbm [thread:$0]  %s310, 128, %s312, %s296
        $region48: #{tpu_custom_call.1} parent=31 // pred_fallthru
          _
      $region32: #{tpu_custom_call.1} parent=5 // pred_fallthru
        _
      %p315 = scmp.le.s32.totalorder 2, %s18
      // Predicated region
      $region49: #{tpu_custom_call.1} parent=5 // pred_check
        %p316 = pneg %p315
      $region50: #{tpu_custom_call.1} parent=5 // pred_check_branch
        %318 = sbr.rel (%p316) target = $region52
      $region51: #{tpu_custom_call.1} parent=5 // pred_region
        %s319 = ssub.s32 %s18, 2
        // Predicated region
        $region53: #{tpu_custom_call.1} parent=51 // pred_check
          %p320 = pneg %p143
        $region54: #{tpu_custom_call.1} parent=51 // pred_check_branch
          %322 = sbr.rel (%p320) target = $region56
        $region55: #{tpu_custom_call.1} parent=51 // pred_region
          %s323 = sand.u32 %s128, 1
          %s324 = scalar_lea.sflag [#allocation4], %s323
          %s325 = sand.u32 %s128, 1
          %s326 = smul.addr %s325, 8
          %s327 = scalar_lea.vmem [#allocation8], %s326
          %329 = dma.done %s324, 128
        $region56: #{tpu_custom_call.1} parent=51 // pred_fallthru
          _
      $region52: #{tpu_custom_call.1} parent=5 // pred_fallthru
        _
    $region6: #{tpu_custom_call.1} parent=1 // loop_footer
      %s22 = sadd.s32 1, %s18
    $region7: #{tpu_custom_call.1} parent=1 // loop_footer_branch
      %17 = sbr.rel target = $region3
    $region8: #{tpu_custom_call.1} parent=1 // loop_exit
      _
    %330 = vsyncpa [#allocation3], 1
    %s331 = scalar_lea.sflag [#allocation3], 1
    %332 = vsyncpa %s331, 1
    %333 = vsyncpa [#allocation6], 1
    %s334 = scalar_lea.sflag [#allocation6], 1
    %335 = vsyncpa %s334, 1
    %336 = vsyncpa [#allocation4], 1
    %s337 = scalar_lea.sflag [#allocation4], 1
    %338 = vsyncpa %s337, 1

</llo_original>
